<compile_context>
chip_gen: v5e
topology: v5e:2x2
jax: 0.10.0
libtpu: 0.0.40
codegen_flags: <defaults>
</compile_context>

<pallas_src>
import jax
import jax.numpy as jnp
from jax.experimental import pallas as pl
from jax.experimental.pallas import tpu as pltpu

_NC = 2          # leading "parallel" grid axis (sharded across TCs on v7x, serial elsewhere)
_LANE = 128
_PAD_D = -40.0   # padded elements: d = -40, t = 0  ->  per-element loss ~ exp(-40) ~ 4e-18


def _seg_ce_kernel(d_ref, t_ref, out_ref, acc_ref):
    """One grid step: a (TM, LW) tile of d = logit1 - logit0 and of the target mask."""
    i = pl.program_id(1)

    @pl.when(i == 0)
    def _init():
        acc_ref[...] = jnp.zeros_like(acc_ref)

    d = d_ref[...].astype(jnp.float32)
    # mirror gt_mask.long(): truncate toward zero, then use as a float in {0., 1.}
    t = t_ref[...].astype(jnp.int32).astype(jnp.float32)

    # 2-class cross-entropy closed form: loss = softplus(d) - t*d   (numerically stable)
    loss = jnp.maximum(d, 0.0) + jnp.log(1.0 + jnp.exp(-jnp.abs(d))) - t * d
    acc_ref[...] += loss

    @pl.when(i == pl.num_programs(1) - 1)
    def _finalize():
        out_ref[...] = jnp.full(out_ref.shape, jnp.sum(acc_ref[...]),
                                dtype=out_ref.dtype)


def _pick_tiling(total):
    """Choose lane width, rows-per-tile, padded element count and tiles per core."""
    lw = 2048 if total >= 2048 * 8 * _NC else _LANE
    tm = 8
    # grow the tile while it stays well under the problem size (keeps padding bounded);
    # 256 x 2048 f32 tiles (2 MiB each, ~10 MiB double-buffered + acc) fit the scoped
    # VMEM budget on v5e/v6e (32/128 MiB) and v7x (32/64 MiB) with plenty of headroom.
    while tm < 256 and lw * (tm * 2) * 2 <= total:
        tm *= 2
    tile = lw * tm
    padded = pl.cdiv(total, _NC * tile) * (_NC * tile)
    tiles_per_core = padded // tile // _NC
    return lw, tm, padded, tiles_per_core


def segment_cross_entropy_loss(logit, mask):
    """logit: (B, 2, H, W) float; mask: (B, H, W) numeric with values in {0, 1}."""
    B, C, H, W = logit.shape
    assert C == 2, "SegmentCrossEntropyLoss views logits as 2 classes"
    N = H * W
    total = B * N
    lw, tm, padded, tpc = _pick_tiling(total)

    # Lane-dense slabs (these reshapes/pads fuse into one XLA pass; no widened copies).
    lg = logit.reshape(B, 2, N)
    d = (lg[:, 1, :] - lg[:, 0, :]).reshape(-1)   # keeps logit dtype
    t = mask.reshape(-1)
    if t.dtype == jnp.bool_:
        t = t.astype(jnp.int8)

    pad = padded - total
    if pad:
        d = jnp.concatenate([d, jnp.full((pad,), _PAD_D, dtype=d.dtype)])
        t = jnp.concatenate([t, jnp.zeros((pad,), dtype=t.dtype)])

    rows = padded // lw
    d2 = d.reshape(rows, lw)
    t2 = t.reshape(rows, lw)

    def im(c, i, _tpc=tpc):
        return (c * _tpc + i, 0)

    cost = pl.CostEstimate(
        flops=6 * padded,
        transcendentals=2 * padded,
        bytes_accessed=int(d2.size * d2.dtype.itemsize
                           + t2.size * t2.dtype.itemsize
                           + _NC * 8 * _LANE * 4),
    )

    partials = pl.pallas_call(
        _seg_ce_kernel,
        out_shape=jax.ShapeDtypeStruct((_NC, 8, _LANE), jnp.float32),
        grid_spec=pltpu.PrefetchScalarGridSpec(
            num_scalar_prefetch=0,
            grid=(_NC, tpc),
            in_specs=[
                pl.BlockSpec((tm, lw), im),
                pl.BlockSpec((tm, lw), im),
            ],
            out_specs=pl.BlockSpec((1, 8, _LANE), lambda c, i: (c, 0, 0)),
            scratch_shapes=[pltpu.VMEM((tm, lw), jnp.float32)],
        ),
        compiler_params=pltpu.CompilerParams(
            dimension_semantics=("parallel", "arbitrary"),
        ),
        cost_estimate=cost,
    )(d2, t2)

    # Per-core partial sums -> global mean (padding contributes ~0).
    return jnp.sum(partials[:, 0, 0]) / jnp.float32(total)


def _reference(logit, mask):
    """Pure-JAX reference matching nn.CrossEntropyLoss(reduction='mean')."""
    B, C, H, W = logit.shape
    l = logit.reshape(B, C, -1).astype(jnp.float32)
    t = mask.reshape(B, -1).astype(jnp.int32)
    logp = jax.nn.log_softmax(l, axis=1)                       # (B, 2, N)
    picked = jnp.take_along_axis(logp, t[:, None, :], axis=1)  # (B, 1, N)
    return -jnp.mean(picked)


if __name__ == "__main__":
    key = jax.random.PRNGKey(0)
    k1, k2 = jax.random.split(key)

    B, C, H, W = 2, 2, 16, 16
    logit = jax.random.normal(k1, (B, C, H, W), dtype=jnp.float32)
    # Binary ground-truth mask (float, like a typical segmentation mask tensor).
    mask = (jax.random.uniform(k2, (B, H, W)) > 0.5).astype(jnp.float32)

    loss = segment_cross_entropy_loss(logit, mask)
    loss = jax.block_until_ready(loss)

    ref = _reference(logit, mask)
    assert jnp.allclose(loss, ref, atol=1e-5, rtol=1e-5), (loss, ref)

    print("KERNEL_OK")
</pallas_src>

<mosaic_0001>
module attributes {stable_mosaic.version = 11 : i64} {
  func.func @_seg_ce_kernel(%arg0: i32, %arg1: i32, %arg2: memref<8x128xf32, #tpu.memory_space<vmem>>, %arg3: memref<8x128xf32, #tpu.memory_space<vmem>>, %arg4: memref<1x8x128xf32, #tpu.memory_space<vmem>>, %arg5: memref<8x128xf32, #tpu.memory_space<vmem>>) attributes {dimension_semantics = [#tpu.dimension_semantics<parallel>, #tpu.dimension_semantics<arbitrary>], iteration_bounds = array<i64: 2, 1>, scalar_prefetch = 0 : i64, scratch_operands = 1 : i64, tpu.core_type = #tpu.core_type<tc>, window_params = [{transform_indices = @transform_0, window_bounds = array<i64: 8, 128>}, {transform_indices = @transform_1, window_bounds = array<i64: 8, 128>}, {transform_indices = @transform_2, window_bounds = array<i64: 1, 8, 128>}]} {
    %c0_i32 = arith.constant 0 : i32
    %0 = arith.cmpi eq, %arg1, %c0_i32 : i32
    %1 = arith.extui %0 : i1 to i32
    %c0_i32_0 = arith.constant 0 : i32
    %2 = arith.cmpi ne, %1, %c0_i32_0 : i32
    scf.if %2 {
      %cst_12 = arith.constant 0.000000e+00 : f32
      %25 = vector.broadcast %cst_12 : f32 to vector<8x128xf32>
      %c0_13 = arith.constant 0 : index
      %c0_14 = arith.constant 0 : index
      %26 = vector.load %arg5[%c0_13, %c0_14] : memref<8x128xf32, #tpu.memory_space<vmem>>, vector<8x128xf32>
      tpu.vector_store %arg5[%c0_13, %c0_14], %25 {strides = array<i32>} : memref<8x128xf32, #tpu.memory_space<vmem>>, vector<8x128xf32>,
    } else {
    }
    %c0 = arith.constant 0 : index
    %c0_1 = arith.constant 0 : index
    %3 = vector.load %arg2[%c0, %c0_1] : memref<8x128xf32, #tpu.memory_space<vmem>>, vector<8x128xf32>
    %c0_2 = arith.constant 0 : index
    %c0_3 = arith.constant 0 : index
    %4 = vector.load %arg3[%c0_2, %c0_3] : memref<8x128xf32, #tpu.memory_space<vmem>>, vector<8x128xf32>
    %5 = arith.fptosi %4 : vector<8x128xf32> to vector<8x128xi32>
    %6 = arith.sitofp %5 : vector<8x128xi32> to vector<8x128xf32>
    %cst = arith.constant 0.000000e+00 : f32
    %7 = vector.broadcast %cst : f32 to vector<8x128xf32>
    %8 = arith.maximumf %3, %7 : vector<8x128xf32>
    %9 = math.absf %3 : vector<8x128xf32>
    %cst_4 = arith.constant 0.000000e+00 : f32
    %10 = vector.broadcast %cst_4 : f32 to vector<8x128xf32>
    %11 = arith.subf %10, %9 : vector<8x128xf32>
    %12 = math.exp %11 : vector<8x128xf32>
    %cst_5 = arith.constant 1.000000e+00 : f32
    %13 = vector.broadcast %cst_5 : f32 to vector<8x128xf32>
    %14 = arith.addf %13, %12 : vector<8x128xf32>
    %15 = math.log %14 : vector<8x128xf32>
    %16 = arith.addf %8, %15 : vector<8x128xf32>
    %17 = arith.mulf %6, %3 : vector<8x128xf32>
    %18 = arith.subf %16, %17 : vector<8x128xf32>
    %c0_6 = arith.constant 0 : index
    %c0_7 = arith.constant 0 : index
    %19 = vector.load %arg5[%c0_6, %c0_7] : memref<8x128xf32, #tpu.memory_space<vmem>>, vector<8x128xf32>
    %20 = arith.addf %19, %18 : vector<8x128xf32>
    %c0_8 = arith.constant 0 : index
    %c0_9 = arith.constant 0 : index
    %21 = vector.load %arg5[%c0_8, %c0_9] : memref<8x128xf32, #tpu.memory_space<vmem>>, vector<8x128xf32>
    tpu.vector_store %arg5[%c0_8, %c0_9], %20 {strides = array<i32>} : memref<8x128xf32, #tpu.memory_space<vmem>>, vector<8x128xf32>,
    %c0_i32_10 = arith.constant 0 : i32
    %22 = arith.cmpi eq, %arg1, %c0_i32_10 : i32
    %23 = arith.extui %22 : i1 to i32
    %c0_i32_11 = arith.constant 0 : i32
    %24 = arith.cmpi ne, %23, %c0_i32_11 : i32
    scf.if %24 {
      %c0_12 = arith.constant 0 : index
      %c0_13 = arith.constant 0 : index
      %25 = vector.load %arg5[%c0_12, %c0_13] : memref<8x128xf32, #tpu.memory_space<vmem>>, vector<8x128xf32>
      %26 = vector.shape_cast %25 : vector<8x128xf32> to vector<1x8x128xf32>
      %cst_14 = arith.constant dense<0.000000e+00> : vector<1xf32>
      %27 = vector.multi_reduction <add>, %26, %cst_14 [1, 2] : vector<1x8x128xf32> to vector<1xf32>
      %28 = vector.shape_cast %27 : vector<1xf32> to vector<1x1x1xf32>
      %29 = vector.extract %28[0, 0, 0] : f32 from vector<1x1x1xf32>
      %30 = vector.broadcast %29 : f32 to vector<1x8x128xf32>
      %c0_15 = arith.constant 0 : index
      %c0_16 = arith.constant 0 : index
      %c0_17 = arith.constant 0 : index
      %31 = vector.load %arg4[%c0_15, %c0_16, %c0_17] : memref<1x8x128xf32, #tpu.memory_space<vmem>>, vector<1x8x128xf32>
      tpu.vector_store %arg4[%c0_15, %c0_16, %c0_17], %30 {strides = array<i32>} : memref<1x8x128xf32, #tpu.memory_space<vmem>>, vector<1x8x128xf32>,
    } else {
    }
    return
  }
  func.func @transform_0(%arg0: i32, %arg1: i32) -> (i32, i32) {
    %c1_i32 = arith.constant 1 : i32
    %0 = arith.muli %arg0, %c1_i32 : i32
    %1 = arith.addi %0, %arg1 : i32
    %c0_i32 = arith.constant 0 : i32
    %c0_i32_0 = arith.constant 0 : i32
    return %1, %c0_i32 : i32, i32
  }
  func.func @transform_1(%arg0: i32, %arg1: i32) -> (i32, i32) {
    %c1_i32 = arith.constant 1 : i32
    %0 = arith.muli %arg0, %c1_i32 : i32
    %1 = arith.addi %0, %arg1 : i32
    %c0_i32 = arith.constant 0 : i32
    %c0_i32_0 = arith.constant 0 : i32
    return %1, %c0_i32 : i32, i32
  }
  func.func @transform_2(%arg0: i32, %arg1: i32) -> (i32, i32, i32) {
    %c0_i32 = arith.constant 0 : i32
    %c0_i32_0 = arith.constant 0 : i32
    %c0_i32_1 = arith.constant 0 : i32
    return %arg0, %c0_i32, %c0_i32_0 : i32, i32, i32
  }
}

</mosaic_0001>

<llo_original>
// kernel: tpu_custom_call.1
$region0: #{tpu_custom_call.1}
  #allocation0 [shape = 'u32[]', space=smem, size = 0x4, offset = 0x4, fixed_abs, tag = 'smem constant byte address 0x4 - core index']
  #allocation1 [shape = 'u32[72,128]{1,0:T(1,128)}', space=vmem, size = 0x9000, scoped, tag = 'internal scratch']
  #allocation2 [shape = 'f32[8,128]{1,0:T(8,128)}', space=vmem, size = 0x1000, scoped, tag = 'scratch operand']
  %s0 = inlined_call_operand.hbm [shape: f32[16,128], index: 0, kind: input, shape index: {}]
  %s1 = inlined_call_operand.hbm [shape: f32[16,128], index: 1, kind: input, shape index: {}]
  %s2 = inlined_call_operand.hbm [shape: f32[2,8,128], index: 2, kind: output, shape index: {}]
  %s3 = sld [smem:[#allocation0]]
  $region57: #{tpu_custom_call.1} parent=0
    _
  %s5 = ssub.s32 1, %s3
  %s6 = scalar_select 0, %s5, %s3
  $region1: #{tpu_custom_call.1} parent=0
    #allocation3 [shape = 'u8[8192]{0}', space=vmem, size = 0x2000, scoped, tag = 'input window, operand 0']
    #allocation4 [shape = 's32[2]{0}', space=sflag, size = 0x8, scoped, tag = 'scoped memory for tpu_custom_call.1']
    #allocation5 [shape = 's32[2]{0}', space=sflag, size = 0x8, scoped, tag = 'scoped memory for tpu_custom_call.1']
    #allocation6 [shape = 'u8[8192]{0}', space=vmem, size = 0x2000, scoped, tag = 'input window, operand 1']
    #allocation7 [shape = 's32[2]{0}', space=sflag, size = 0x8, scoped, tag = 'scoped memory for tpu_custom_call.1']
    #allocation8 [shape = 'u8[8192]{0}', space=vmem, size = 0x2000, scoped, tag = 'output window, operand 0']
    %7 = vsyncpa [#allocation4], 0
    %s8 = scalar_lea.sflag [#allocation4], 1
    %9 = vsyncpa %s8, 0
    %10 = vsyncpa [#allocation7], 0
    %s11 = scalar_lea.sflag [#allocation7], 1
    %12 = vsyncpa %s11, 0
    %13 = vsyncpa [#allocation5], 0
    %s14 = scalar_lea.sflag [#allocation5], 1
    %15 = vsyncpa %s14, 0
    loop: start=0, step=1, limit=4
    $region2: #{tpu_custom_call.1} parent=1 // loop_pre_header
      _
    $region3: #{tpu_custom_call.1} parent=1 // loop_header
      %s17 = sphi 0, %s21
      %p18 = scmp.ge.s32.totalorder %s17, 4
      %s24 = sphi 0, %s36
      %s25 = sphi 0, %s32
      %s26 = sphi 0, %s24
      %s27 = sphi 0, %s25
      %s28 = sphi 0, %s26
      %s29 = sphi 0, %s27
      %s41 = sphi 0, %s43
      %s44 = sphi 0, %s41
      %s45 = sphi 0, %s44
      %s61 = sphi 0, %s45
      %s69 = sphi 0, %s71
      %s72 = sphi 0, %s69
      %s73 = sphi 0, %s72
      %s89 = sphi 0, %s73
      %s95 = sphi 0, %s97
      %s98 = sphi 0, %s95
      %s99 = sphi 0, %s98
      %s115 = sphi 0, %s99
    $region4: #{tpu_custom_call.1} parent=1 // loop_header_branch
      %20 = sbr.rel (%p18) target = $region8
    $region5: #{tpu_custom_call.1} parent=1 // loop_body
      %s22 = ssub.s32 %s17, 1
      %s23 = ssub.s32 %s17, 2
      %s30 = sadd.s32 1, %s25
      %p31 = scmp.ge.s32.totalorder %s30, 1
      %s32 = scalar_select %p31, 0, %s30
      %s33 = sadd.s32 1, %s24
      %s34 = scalar_select %p31, %s33, %s24
      %p35 = scmp.ge.s32.totalorder %s34, 2
      %s36 = scalar_select %p35, 0, %s34
      %s37 = sadd.s32 %s24, %s25
      %s38 = sadd.s32 %s36, %s32
      %s39 = ssub.s32 %s37, %s38
      %p40 = scmp.eq.s32.totalorder %s39, 0
      %s42 = sadd.s32 %s41, 1
      %s43 = scalar_select %p40, %s41, %s42
      %p46 = pneg %p40
      %p47 = scmp.eq.s32.totalorder %s17, 1
      %p48 = por %p46, %p47
      %p49 = scmp.ne.s32.totalorder %s41, %s44
      %p50 = scmp.eq.s32.totalorder %s17, 0
      %p51 = por %p49, %p50
      %p52 = scmp.ne.s32.totalorder %s41, %s44
      %p53 = scmp.eq.s32.totalorder %s22, 1
      %p54 = por %p52, %p53
      %p55 = scmp.ne.s32.totalorder %s44, %s45
      %p56 = scmp.eq.s32.totalorder %s22, 0
      %p57 = por %p55, %p56
      %p58 = scmp.ne.s32.totalorder %s44, %s45
      %p59 = scmp.eq.s32.totalorder %s23, 1
      %p60 = por %p58, %p59
      %p62 = scmp.ne.s32.totalorder %s45, %s61
      %p63 = scmp.eq.s32.totalorder %s23, 0
      %p64 = por %p62, %p63
      %s65 = sadd.s32 %s24, %s25
      %s66 = sadd.s32 %s36, %s32
      %s67 = ssub.s32 %s65, %s66
      %p68 = scmp.eq.s32.totalorder %s67, 0
      %s70 = sadd.s32 %s69, 1
      %s71 = scalar_select %p68, %s69, %s70
      %p74 = pneg %p68
      %p75 = scmp.eq.s32.totalorder %s17, 1
      %p76 = por %p74, %p75
      %p77 = scmp.ne.s32.totalorder %s69, %s72
      %p78 = scmp.eq.s32.totalorder %s17, 0
      %p79 = por %p77, %p78
      %p80 = scmp.ne.s32.totalorder %s69, %s72
      %p81 = scmp.eq.s32.totalorder %s22, 1
      %p82 = por %p80, %p81
      %p83 = scmp.ne.s32.totalorder %s72, %s73
      %p84 = scmp.eq.s32.totalorder %s22, 0
      %p85 = por %p83, %p84
      %p86 = scmp.ne.s32.totalorder %s72, %s73
      %p87 = scmp.eq.s32.totalorder %s23, 1
      %p88 = por %p86, %p87
      %p90 = scmp.ne.s32.totalorder %s73, %s89
      %p91 = scmp.eq.s32.totalorder %s23, 0
      %p92 = por %p90, %p91
      %s93 = ssub.s32 %s24, %s36
      %p94 = scmp.eq.s32.totalorder %s93, 0
      %s96 = sadd.s32 %s95, 1
      %s97 = scalar_select %p94, %s95, %s96
      %p100 = pneg %p94
      %p101 = scmp.eq.s32.totalorder %s17, 1
      %p102 = por %p100, %p101
      %p103 = scmp.ne.s32.totalorder %s95, %s98
      %p104 = scmp.eq.s32.totalorder %s17, 0
      %p105 = por %p103, %p104
      %p106 = scmp.ne.s32.totalorder %s95, %s98
      %p107 = scmp.eq.s32.totalorder %s22, 1
      %p108 = por %p106, %p107
      %p109 = scmp.ne.s32.totalorder %s98, %s99
      %p110 = scmp.eq.s32.totalorder %s22, 0
      %p111 = por %p109, %p110
      %p112 = scmp.ne.s32.totalorder %s98, %s99
      %p113 = scmp.eq.s32.totalorder %s23, 1
      %p114 = por %p112, %p113
      %p116 = scmp.ne.s32.totalorder %s99, %s115
      %p117 = scmp.eq.s32.totalorder %s23, 0
      %p118 = por %p116, %p117
      %p119 = scmp.le.s32.totalorder 1, %s17
      %p120 = scmp.lt.s32.totalorder %s17, 3
      %p121 = pnand %p119, %p120
      %p122 = pneg %p121
      // Predicated region
      $region9: #{tpu_custom_call.1} parent=5 // pred_check
        _
      $region10: #{tpu_custom_call.1} parent=5 // pred_check_branch
        %124 = sbr.rel (%p121) target = $region12
      $region11: #{tpu_custom_call.1} parent=5 // pred_region
        %s125 = ssub.s32 %s17, 1
      $region12: #{tpu_custom_call.1} parent=5 // pred_fallthru
        _
      %p126 = scmp.lt.s32.totalorder %s17, 2
      // Predicated region
      $region13: #{tpu_custom_call.1} parent=5 // pred_check
        %p127 = pneg %p126
      $region14: #{tpu_custom_call.1} parent=5 // pred_check_branch
        %129 = sbr.rel (%p127) target = $region16
      $region15: #{tpu_custom_call.1} parent=5 // pred_region
        // Predicated region
        $region17: #{tpu_custom_call.1} parent=15 // pred_check
          %p130 = pneg %p51
        $region18: #{tpu_custom_call.1} parent=15 // pred_check_branch
          %132 = sbr.rel (%p130) target = $region20
        $region19: #{tpu_custom_call.1} parent=15 // pred_region
          %s133 = sand.u32 %s41, 1
          %s134 = scalar_lea.sflag [#allocation4], %s133
          %s135 = sand.u32 %s41, 1
          %s136 = smul.addr %s135, 8
          %s137 = scalar_lea.vmem [#allocation3], %s136
          %s138 = sadd.s32 %s24, %s25
          %140 = vsyncadd %s134, 0
          %s141 = smul.addr %s138, 8
          %s142 = scalar_lea.hbm %s0, %s141
          %s144 = sshll.u32 %s142, 4
          %s145 = int_to_ptr.hbm [resolvable:$true] %s144
          %s146 = sshll.u32 %s137, 4
          %s147 = int_to_ptr.vmem [resolvable:$true] %s146
          %149 = dma.hbm_to_vmem [thread:$0]  %s145, 128, %s147, %s134
        $region20: #{tpu_custom_call.1} parent=15 // pred_fallthru
          _
        // Predicated region
        $region21: #{tpu_custom_call.1} parent=15 // pred_check
          %p150 = pneg %p79
        $region22: #{tpu_custom_call.1} parent=15 // pred_check_branch
          %152 = sbr.rel (%p150) target = $region24
        $region23: #{tpu_custom_call.1} parent=15 // pred_region
          %s153 = sand.u32 %s69, 1
          %s154 = scalar_lea.sflag [#allocation7], %s153
          %s155 = sand.u32 %s69, 1
          %s156 = smul.addr %s155, 8
          %s157 = scalar_lea.vmem [#allocation6], %s156
          %s158 = sadd.s32 %s24, %s25
          %160 = vsyncadd %s154, 0
          %s161 = smul.addr %s158, 8
          %s162 = scalar_lea.hbm %s1, %s161
          %s164 = sshll.u32 %s162, 4
          %s165 = int_to_ptr.hbm [resolvable:$true] %s164
          %s166 = sshll.u32 %s157, 4
          %s167 = int_to_ptr.vmem [resolvable:$true] %s166
          %169 = dma.hbm_to_vmem [thread:$0]  %s165, 128, %s167, %s154
        $region24: #{tpu_custom_call.1} parent=15 // pred_fallthru
          _
      $region16: #{tpu_custom_call.1} parent=5 // pred_fallthru
        _
      %p170 = scmp.le.s32.totalorder 1, %s17
      %p171 = scmp.lt.s32.totalorder %s17, 3
      %p172 = pnand %p170, %p171
      %p173 = pneg %p172
      // Predicated region
      $region25: #{tpu_custom_call.1} parent=5 // pred_check
        _
      $region26: #{tpu_custom_call.1} parent=5 // pred_check_branch
        %175 = sbr.rel (%p172) target = $region28
      $region27: #{tpu_custom_call.1} parent=5 // pred_region
        %s176 = ssub.s32 %s17, 1
        %s177 = sand.u32 %s44, 1
        %s178 = scalar_lea.sflag [#allocation4], %s177
        %s179 = sand.u32 %s44, 1
        %s180 = smul.addr %s179, 8
        %s181 = scalar_lea.vmem [#allocation3], %s180
        // Predicated region
        $region29: #{tpu_custom_call.1} parent=27 // pred_check
          %p182 = pneg %p57
        $region30: #{tpu_custom_call.1} parent=27 // pred_check_branch
          %184 = sbr.rel (%p182) target = $region32
        $region31: #{tpu_custom_call.1} parent=27 // pred_region
          %186 = dma.done %s178, 128
        $region32: #{tpu_custom_call.1} parent=27 // pred_fallthru
          _
        %s187 = sand.u32 %s72, 1
        %s188 = scalar_lea.sflag [#allocation7], %s187
        %s189 = sand.u32 %s72, 1
        %s190 = smul.addr %s189, 8
        %s191 = scalar_lea.vmem [#allocation6], %s190
        // Predicated region
        $region33: #{tpu_custom_call.1} parent=27 // pred_check
          %p192 = pneg %p85
        $region34: #{tpu_custom_call.1} parent=27 // pred_check_branch
          %194 = sbr.rel (%p192) target = $region36
        $region35: #{tpu_custom_call.1} parent=27 // pred_region
          %196 = dma.done %s188, 128
        $region36: #{tpu_custom_call.1} parent=27 // pred_fallthru
          _
        %s197 = sand.u32 %s44, 1
        %s198 = scalar_lea.sflag [#allocation4], %s197
        %s199 = sand.u32 %s44, 1
        %s200 = smul.addr %s199, 8
        %s201 = scalar_lea.vmem [#allocation3], %s200
        %p202 = pneg %p57
        %p203 = pneg %p54
        %s204 = sand.u32 %s72, 1
        %s205 = scalar_lea.sflag [#allocation7], %s204
        %s206 = sand.u32 %s72, 1
        %s207 = smul.addr %s206, 8
        %s208 = scalar_lea.vmem [#allocation6], %s207
        %p209 = pneg %p85
        %p210 = pneg %p82
        %p211 = pneg %p111
        %p212 = pneg %p108
        %s213 = sand.u32 %s98, 1
        %s214 = scalar_lea.sflag [#allocation5], %s213
        %s215 = sand.u32 %s98, 1
        %s216 = smul.addr %s215, 8
        %s217 = scalar_lea.vmem [#allocation8], %s216
        %s218 = sadd.s32 %s26, %s27
        %s219 = sadd.s32 %s26, %s27
        %p220 = scmp.eq.s32.totalorder %s27, 0
        // Predicated region
        $region37: #{tpu_custom_call.1} parent=27 // pred_check
          %p221 = pneg %p220
        $region38: #{tpu_custom_call.1} parent=27 // pred_check_branch
          %223 = sbr.rel (%p221) target = $region40
        $region39: #{tpu_custom_call.1} parent=27 // pred_region
          %224 = vst [vmem:[#allocation2] sm:$0xff] 0.0
        $region40: #{tpu_custom_call.1} parent=27 // pred_fallthru
          _
        %v225 = vld [vmem:[%s181] sm:$0xff]
        %v226 = vld [vmem:[%s191] sm:$0xff]
        %v227 = vcvt.f32.s32.to.zero.pseudo %v226
        %v228 = vcvt.s32.f32 %v227
        %v229 = vmax.f32 %v225, 0.0
        %v230 = vand.u32 2147483647, %v225
        %v231 = vsub.f32 0.0, %v230
        %v232 = vmul.f32 %v231, 1.442695
        %v233 = vpow.pop %v232
        %v234 = vadd.f32 %v233, 1.0
        %v235 = vlog2.pop %v234
        %v236 = vmul.f32 %v235, 0.6931472
        %v237 = vadd.f32 %v229, %v236
        %v238 = vmul.f32 %v228, %v225
        %v239 = vsub.f32 %v237, %v238
        %v240 = vld [vmem:[#allocation2] sm:$0xff]
        %v241 = vadd.f32 %v240, %v239
        %242 = vst [vmem:[#allocation2] sm:$0xff] %v241
        // Predicated region
        $region41: #{tpu_custom_call.1} parent=27 // pred_check
          %p243 = pneg %p220
        $region42: #{tpu_custom_call.1} parent=27 // pred_check_branch
          %245 = sbr.rel (%p243) target = $region44
        $region43: #{tpu_custom_call.1} parent=27 // pred_region
          %v246 = vld [vmem:[#allocation2] sm:$0xff]
          %247 = vadd.xlane.f32.xlu0 %v246
          %v248 = vpop.xlane.xlu0 %247
          %v249 = vrot.slane %v248, 4
          %v250 = vadd.f32 %v248, %v249
          %v251 = vrot.slane %v250, 2
          %v252 = vadd.f32 %v250, %v251
          %v253 = vrot.slane %v252, 1
          %v254 = vadd.f32 %v252, %v253
          %s255 = vtos %v254
          %v256 = vstv %s255
          %257 = vst [vmem:[%s217] sm:$0xff] %v256
        $region44: #{tpu_custom_call.1} parent=27 // pred_fallthru
          _
        %s258 = sand.u32 %s98, 1
        %s259 = scalar_lea.sflag [#allocation5], %s258
        %s260 = sand.u32 %s98, 1
        %s261 = smul.addr %s260, 8
        %s262 = scalar_lea.vmem [#allocation8], %s261
        // Predicated region
        $region45: #{tpu_custom_call.1} parent=27 // pred_check
          %p263 = pneg %p108
        $region46: #{tpu_custom_call.1} parent=27 // pred_check_branch
          %265 = sbr.rel (%p263) target = $region48
        $region47: #{tpu_custom_call.1} parent=27 // pred_region
          %267 = vsyncadd %s259, 0
          %s268 = smul.addr %s26, 8
          %s269 = scalar_lea.hbm %s2, %s268
          %s271 = sshll.u32 %s262, 4
          %s272 = int_to_ptr.vmem [resolvable:$true] %s271
          %s273 = sshll.u32 %s269, 4
          %s274 = int_to_ptr.hbm [resolvable:$true] %s273
          %276 = dma.vmem_to_hbm [thread:$0]  %s272, 128, %s274, %s259
        $region48: #{tpu_custom_call.1} parent=27 // pred_fallthru
          _
      $region28: #{tpu_custom_call.1} parent=5 // pred_fallthru
        _
      %p277 = scmp.le.s32.totalorder 2, %s17
      // Predicated region
      $region49: #{tpu_custom_call.1} parent=5 // pred_check
        %p278 = pneg %p277
      $region50: #{tpu_custom_call.1} parent=5 // pred_check_branch
        %280 = sbr.rel (%p278) target = $region52
      $region51: #{tpu_custom_call.1} parent=5 // pred_region
        %s281 = ssub.s32 %s17, 2
        // Predicated region
        $region53: #{tpu_custom_call.1} parent=51 // pred_check
          %p282 = pneg %p114
        $region54: #{tpu_custom_call.1} parent=51 // pred_check_branch
          %284 = sbr.rel (%p282) target = $region56
        $region55: #{tpu_custom_call.1} parent=51 // pred_region
          %s285 = sand.u32 %s99, 1
          %s286 = scalar_lea.sflag [#allocation5], %s285
          %s287 = sand.u32 %s99, 1
          %s288 = smul.addr %s287, 8
          %s289 = scalar_lea.vmem [#allocation8], %s288
          %291 = dma.done %s286, 128
        $region56: #{tpu_custom_call.1} parent=51 // pred_fallthru
          _
      $region52: #{tpu_custom_call.1} parent=5 // pred_fallthru
        _
    $region6: #{tpu_custom_call.1} parent=1 // loop_footer
      %s21 = sadd.s32 1, %s17
    $region7: #{tpu_custom_call.1} parent=1 // loop_footer_branch
      %16 = sbr.rel target = $region3
    $region8: #{tpu_custom_call.1} parent=1 // loop_exit
      _
    %292 = vsyncpa [#allocation4], 1
    %s293 = scalar_lea.sflag [#allocation4], 1
    %294 = vsyncpa %s293, 1
    %295 = vsyncpa [#allocation7], 1
    %s296 = scalar_lea.sflag [#allocation7], 1
    %297 = vsyncpa %s296, 1
    %298 = vsyncpa [#allocation5], 1
    %s299 = scalar_lea.sflag [#allocation5], 1
    %300 = vsyncpa %s299, 1

</llo_original>
